<compile_context>
chip_gen: v7x
topology: tpu7x:2x2x1
jax: 0.10.0
libtpu: 0.0.40
codegen_flags: <defaults>
</compile_context>

<pallas_src>
import functools

import numpy as np
import jax
import jax.numpy as jnp
from jax import lax
from jax.experimental import pallas as pl
from jax.experimental.pallas import tpu as pltpu

F32 = jnp.float32
NEG = -1000000000.0
VMEM_LIMIT = 32 * 1024 * 1024   # explicit scoped-VMEM budget for every call


def _sigmoid(v):
    # logistic via tanh: stays on the EUP slot, no exp(-v) overflow.
    return 0.5 * (jnp.tanh(0.5 * v) + 1.0)


# --------------------------------------------------------------------------
# BlockSpec helpers (grid over batch; batch dim squeezed out of kernel views)
# --------------------------------------------------------------------------

def _per_batch_spec(a):
    nd = a.ndim - 1
    return pl.BlockSpec((None,) + a.shape[1:], lambda b, nd=nd: (b,) + (0,) * nd)


def _whole_spec(a):
    nd = a.ndim
    return pl.BlockSpec(a.shape, lambda b, nd=nd: (0,) * nd)


# --------------------------------------------------------------------------
# Kernel 1: fused bidirectional sentence-encoder LSTM (final states only)
# --------------------------------------------------------------------------

def _enc_bilstm_kernel(emb_ref, wih_f_ref, wih_b_ref, whh_f_ref, whh_b_ref,
                       b_f_ref, b_b_ref, hn_ref, xpf_ref, xpb_ref):
    """emb_ref: (T*BS, De) time-major.  Weights packed [i|f|g|o] per direction:
    wih_*: (De,4H), whh_*: (H,4H), b_*: (1,4H).  hn_ref: (BS, 2H).
    xpf/xpb: (T*BS, 4H) VMEM scratch (hoisted packed input projections)."""
    BS = hn_ref.shape[0]
    H = whh_f_ref.shape[0]
    T = emb_ref.shape[0] // BS

    emb = emb_ref[...]
    # ONE packed input-projection dot per direction (was 8 per-gate dots).
    xpf_ref[...] = (jnp.dot(emb, wih_f_ref[...],
                            preferred_element_type=jnp.float32) + b_f_ref[...])
    xpb_ref[...] = (jnp.dot(emb, wih_b_ref[...],
                            preferred_element_type=jnp.float32) + b_b_ref[...])
    whh_f = whh_f_ref[...]
    whh_b = whh_b_ref[...]

    def step(t, carry):
        hf, cf, hb, cb = carry
        sf = pl.ds(pl.multiple_of(t * BS, BS), BS)
        sb = pl.ds(pl.multiple_of((T - 1 - t) * BS, BS), BS)
        # forward direction: one packed recurrent dot per step
        gf = xpf_ref[sf, :] + jnp.dot(hf, whh_f, preferred_element_type=jnp.float32)
        i = _sigmoid(gf[:, 0:H]);          f = _sigmoid(gf[:, H:2 * H])
        g = jnp.tanh(gf[:, 2 * H:3 * H]);  o = _sigmoid(gf[:, 3 * H:4 * H])
        cf = f * cf + i * g
        hf = o * jnp.tanh(cf)
        # backward direction (reversed time index)
        gb = xpb_ref[sb, :] + jnp.dot(hb, whh_b, preferred_element_type=jnp.float32)
        ib = _sigmoid(gb[:, 0:H]);          fb = _sigmoid(gb[:, H:2 * H])
        gg = jnp.tanh(gb[:, 2 * H:3 * H]);  ob = _sigmoid(gb[:, 3 * H:4 * H])
        cb = fb * cb + ib * gg
        hb = ob * jnp.tanh(cb)
        return hf, cf, hb, cb

    z = jnp.zeros((BS, H), jnp.float32)
    hf, _, hb, _ = lax.fori_loop(0, T, step, (z, z, z, z))
    hn_ref[...] = jnp.concatenate([hf, hb], axis=-1)


def encoder_bilstm(emb_flat, wih_f, wih_b, whh_f, whh_b, b_f, b_b, BS):
    # TODO(synk): at realistic T*BS grid this over batch chunks (parallel) so
    # emb + xp scratch stay within v7x's 64 MiB VMEM.
    TB = emb_flat.shape[0]
    H = whh_f.shape[0]
    return pl.pallas_call(
        _enc_bilstm_kernel,
        out_shape=jax.ShapeDtypeStruct((BS, 2 * H), F32),
        scratch_shapes=[pltpu.VMEM((TB, 4 * H), F32),
                        pltpu.VMEM((TB, 4 * H), F32)],
        compiler_params=pltpu.CompilerParams(vmem_limit_bytes=VMEM_LIMIT),
    )(emb_flat, wih_f, wih_b, whh_f, whh_b, b_f, b_b)


# --------------------------------------------------------------------------
# Kernel 2: fused GRNGOB (all GNN layers, per-batch grid, weights resident)
# --------------------------------------------------------------------------

def _gnn_kernel(sent_ref, ent_ref, eoh_ref, eoht_ref, mse_ref, mset_ref,
                s2s_ref, sm_ref, wm_ref,
                edge_ref,
                g1s_ref, g1e_ref, g1l_ref, g1b_ref,
                g2e_ref, g2s_ref, g2l_ref, g2b_ref,
                swxs_ref, swxn_ref, swxe_ref, swxg_ref, swh_ref, sbx_ref, sbu_ref,
                ewxe_ref, ewxn_ref, ewxg_ref, ewh_ref, ebx_ref, ebu_ref,
                gwxs_ref, gwxe_ref, gwh_ref, gbx_ref, gbu_ref,
                sh_ref, eh_ref, gh_ref, *, gnnl):
    S, Hs = sent_ref.shape
    E = ent_ref.shape[0]
    He = eh_ref.shape[-1]

    sent = sent_ref[...]
    ent = ent_ref[...]
    eoh = eoh_ref[...]        # (S,E,4) edge-type one-hot
    eoh_t = eoht_ref[...]     # (E,S,4)
    mse = mse_ref[...]        # (S,E)
    mse_t = mset_ref[...]     # (E,S)
    s2s = s2s_ref[...]        # (S,S)
    sm = sm_ref[...]          # (S,1)
    wm = wm_ref[...]          # (E,1)
    edge = edge_ref[...]      # (4, Ld)

    # Loop-invariant label tensors rebuilt in VMEM from the tiny edge table:
    # no (B,S,E,*) label streams from HBM, only elementwise broadcast-MACs.
    proj1 = (jnp.dot(edge, g1l_ref[...], preferred_element_type=jnp.float32)
             + g1b_ref[...])                                     # (4, He+Ld)
    proj2 = (jnp.dot(edge, g2l_ref[...], preferred_element_type=jnp.float32)
             + g2b_ref[...])                                     # (4, Hs+Ld)
    lab = sum(eoh[:, :, r:r + 1] * edge[r:r + 1, :] for r in range(4))     # (S,E,Ld)
    lab1 = sum(eoh[:, :, r:r + 1] * proj1[r:r + 1, :] for r in range(4))   # (S,E,He+Ld)
    lab_t = sum(eoh_t[:, :, r:r + 1] * edge[r:r + 1, :] for r in range(4))   # (E,S,Ld)
    lab2 = sum(eoh_t[:, :, r:r + 1] * proj2[r:r + 1, :] for r in range(4))   # (E,S,Hs+Ld)

    # Loop-invariant x-side GRU projections (hoisted out of the layer loop).
    xs_sent = (jnp.dot(sent, swxs_ref[...], preferred_element_type=jnp.float32)
               + sbx_ref[...])                                   # (S, 3Hs)
    xe_ent = (jnp.dot(ent, ewxe_ref[...], preferred_element_type=jnp.float32)
              + ebx_ref[...])                                    # (E, 3He)

    g1s, g1e = g1s_ref[...], g1e_ref[...]
    g2e, g2s = g2e_ref[...], g2s_ref[...]
    swx_ns, swx_ne, swx_g = swxn_ref[...], swxe_ref[...], swxg_ref[...]
    swh, sbu = swh_ref[...], sbu_ref[...]
    ewx_ns, ewx_g = ewxn_ref[...], ewxg_ref[...]
    ewh, ebu = ewh_ref[...], ebu_ref[...]
    gwx_s, gwx_e = gwxs_ref[...], gwxe_ref[...]
    gwh, gbx, gbu = gwh_ref[...], gbx_ref[...], gbu_ref[...]

    ssum = jnp.sum(sm, axis=0, keepdims=True)              # (1,1)
    wsum = jnp.sum(wm, axis=0, keepdims=True) + 1.0        # (1,1)

    def gru(xg, h, wh, bu, dh):
        # packed GRUCell: xg already holds x@[Wr|Wz|Wc] + bias, one h-side dot.
        hg = jnp.dot(h, wh, preferred_element_type=jnp.float32)
        r = _sigmoid(xg[:, 0:dh] + hg[:, 0:dh])
        z = _sigmoid(xg[:, dh:2 * dh] + hg[:, dh:2 * dh])
        u = jnp.tanh(xg[:, 2 * dh:3 * dh] + r * (hg[:, 2 * dh:3 * dh] + bu))
        return z * h + (1.0 - z) * u

    def layer(_, carry):
        s_h, e_h, g_h = carry
        s_neigh_s_h = jnp.dot(s2s, s_h, preferred_element_type=jnp.float32)

        # gate1([s_h | e_h | label]) as split dots -- no (S,E,*) concat
        sp1 = jnp.dot(s_h, g1s, preferred_element_type=jnp.float32)
        ep1 = jnp.dot(e_h, g1e, preferred_element_type=jnp.float32)
        gate1 = _sigmoid(sp1[:, None, :] + ep1[None, :, :] + lab1)        # (S,E,He+Ld)
        wg1 = gate1 * mse[:, :, None]
        ne_e = jnp.sum(e_h[None, :, :] * wg1[:, :, :He], axis=1)          # (S,He)
        ne_l = jnp.sum(lab * wg1[:, :, He:], axis=1)                      # (S,Ld)
        s_neigh_e_h = jnp.concatenate([ne_e, ne_l], axis=-1)              # (S,He+Ld)

        # gate2([e_h | s_h | label_t]) as split dots
        ep2 = jnp.dot(e_h, g2e, preferred_element_type=jnp.float32)
        sp2 = jnp.dot(s_h, g2s, preferred_element_type=jnp.float32)
        gate2 = _sigmoid(ep2[:, None, :] + sp2[None, :, :] + lab2)        # (E,S,Hs+Ld)
        wg2 = gate2 * mse_t[:, :, None]
        ns_s = jnp.sum(s_h[None, :, :] * wg2[:, :, :Hs], axis=1)          # (E,Hs)
        ns_l = jnp.sum(lab_t * wg2[:, :, Hs:], axis=1)                    # (E,Ld)
        e_neigh_s_h = jnp.concatenate([ns_s, ns_l], axis=-1)              # (E,Hs+Ld)

        # SGRU step: x-side gate pre-activations as split dots (g_h as bias)
        xg_s = (xs_sent
                + jnp.dot(s_neigh_s_h, swx_ns, preferred_element_type=jnp.float32)
                + jnp.dot(s_neigh_e_h, swx_ne, preferred_element_type=jnp.float32)
                + jnp.dot(g_h, swx_g, preferred_element_type=jnp.float32))
        new_sh = gru(xg_s, s_h, swh, sbu, Hs) * sm

        xg_e = (xe_ent
                + jnp.dot(e_neigh_s_h, ewx_ns, preferred_element_type=jnp.float32)
                + jnp.dot(g_h, ewx_g, preferred_element_type=jnp.float32))
        new_eh = gru(xg_e, e_h, ewh, ebu, He) * wm

        sh_mean = jnp.sum(new_sh, axis=0, keepdims=True) / ssum
        eh_mean = jnp.sum(new_eh, axis=0, keepdims=True) / wsum
        xg_g = (jnp.dot(sh_mean, gwx_s, preferred_element_type=jnp.float32)
                + jnp.dot(eh_mean, gwx_e, preferred_element_type=jnp.float32) + gbx)
        new_g = gru(xg_g, g_h, gwh, gbu, Hs)
        return new_sh, new_eh, new_g

    s_h, e_h, g_h = lax.fori_loop(
        0, gnnl, layer,
        (jnp.zeros((S, Hs), jnp.float32),
         jnp.zeros((E, He), jnp.float32),
         jnp.zeros((1, Hs), jnp.float32)))
    sh_ref[...] = s_h
    eh_ref[...] = e_h
    gh_ref[...] = g_h


def gnn_forward(p, cfg, sentences, entity_emb, eoh, eoh_t, mse, mse_t,
                s2s, smask, wmask):
    B, S, Hs = sentences.shape
    E = entity_emb.shape[1]
    He = cfg['ehid']

    batch_args = [sentences, entity_emb, eoh, eoh_t, mse, mse_t, s2s,
                  smask[..., None], wmask[..., None]]
    weight_args = [p['edgeemb'],
                   p['gate1_ws'], p['gate1_we'], p['gate1_wl'], p['gate1_b'],
                   p['gate2_we'], p['gate2_ws'], p['gate2_wl'], p['gate2_b'],
                   p['s_wx_sent'], p['s_wx_ns'], p['s_wx_ne'], p['s_wx_g'],
                   p['s_wh'], p['s_bx'], p['s_bu'],
                   p['e_wx_ent'], p['e_wx_ns'], p['e_wx_g'],
                   p['e_wh'], p['e_bx'], p['e_bu'],
                   p['g_wx_s'], p['g_wx_e'], p['g_wh'], p['g_bx'], p['g_bu']]

    out_shape = (jax.ShapeDtypeStruct((B, S, Hs), F32),
                 jax.ShapeDtypeStruct((B, E, He), F32),
                 jax.ShapeDtypeStruct((B, 1, Hs), F32))
    out_specs = (pl.BlockSpec((None, S, Hs), lambda b: (b, 0, 0)),
                 pl.BlockSpec((None, E, He), lambda b: (b, 0, 0)),
                 pl.BlockSpec((None, 1, Hs), lambda b: (b, 0, 0)))

    return pl.pallas_call(
        functools.partial(_gnn_kernel, gnnl=cfg['gnnl']),
        grid=(B,),
        in_specs=[_per_batch_spec(a) for a in batch_args]
                 + [_whole_spec(a) for a in weight_args],
        out_specs=out_specs,
        out_shape=out_shape,
        compiler_params=pltpu.CompilerParams(
            dimension_semantics=("parallel",), vmem_limit_bytes=VMEM_LIMIT),
    )(*(batch_args + weight_args))


# --------------------------------------------------------------------------
# Kernel 3: batched decoder LSTM + pointer attention + masked NLL loss
# --------------------------------------------------------------------------

def _dec_ptr_loss_kernel(dec_ref, h0_ref, key_ref, mask_ref, oh_ref, tm_ref,
                         wih_ref, whh_ref, bg_ref,
                         w0_ref, b0_ref, w2_ref, b2_ref,
                         loss_ref, xp_ref):
    """dec_ref: (L*B, Dr) time-major; h0: (B,Dr); key: (B,S,Dm);
    mask/oh: (L,B,S); tm: (L,B,1); dec weights packed [i|f|g|o] (Dr,4Dr);
    loss: (B,1); xp: (L*B,4Dr) scratch (hoisted packed input projections)."""
    B, Dr = h0_ref.shape
    L = mask_ref.shape[0]

    # Hoisted packed input projection: ONE MXU dot covering every timestep.
    xp_ref[...] = (jnp.dot(dec_ref[...], wih_ref[...],
                           preferred_element_type=jnp.float32) + bg_ref[...])
    whh = whh_ref[...]
    key = key_ref[...]                    # (B, S, Dm) -- loop invariant
    w0, b0 = w0_ref[...], b0_ref[...]
    w2, b2 = w2_ref[...], b2_ref[...]

    def step(t, carry):
        h, c, loss = carry
        # whole-batch recurrence: one packed recurrent dot, (B,4Dr) gates
        sl = pl.ds(pl.multiple_of(t * B, B), B)
        gates = xp_ref[sl, :] + jnp.dot(h, whh, preferred_element_type=jnp.float32)
        i = _sigmoid(gates[:, 0:Dr]);            f = _sigmoid(gates[:, Dr:2 * Dr])
        g = jnp.tanh(gates[:, 2 * Dr:3 * Dr]);   o = _sigmoid(gates[:, 3 * Dr:4 * Dr])
        c = f * c + i * g
        h = o * jnp.tanh(c)
        # pointer attention + masked log-softmax + NLL for this timestep
        # (per-step == L-tiling: only a (B,S,Dm) temp lives in VMEM/vregs)
        q = jnp.dot(h, w0, preferred_element_type=jnp.float32) + b0      # (B, Dm)
        e = jnp.sum(jnp.tanh(q[:, None, :] + key) * w2, axis=-1) + b2    # (B, S)
        e = jnp.where(mask_ref[t] > 0.5, NEG, e)
        m = jnp.max(e, axis=-1, keepdims=True)
        lse = jnp.log(jnp.sum(jnp.exp(e - m), axis=-1, keepdims=True)) + m
        nll = -jnp.sum((e - lse) * oh_ref[t], axis=-1, keepdims=True)    # (B, 1)
        loss = loss + nll * tm_ref[t]
        return h, c, loss

    _, _, loss = lax.fori_loop(
        0, L, step,
        (h0_ref[...], jnp.zeros((B, Dr), jnp.float32),
         jnp.zeros((B, 1), jnp.float32)))
    loss_ref[...] = loss


def decoder_pointer_loss(p, dec_tm, h0, key, mask_tm, oh_tm, tm_tm):
    B, Dr = h0.shape
    L = mask_tm.shape[0]
    losses = pl.pallas_call(
        _dec_ptr_loss_kernel,
        out_shape=jax.ShapeDtypeStruct((B, 1), F32),
        scratch_shapes=[pltpu.VMEM((L * B, 4 * Dr), F32)],
        compiler_params=pltpu.CompilerParams(vmem_limit_bytes=VMEM_LIMIT),
    )(dec_tm, h0, key, mask_tm, oh_tm, tm_tm,
      p['dec_wih'], p['dec_whh'], p['dec_b'],
      p['lin0_w'], p['lin0_b'], p['lin2_w'], p['lin2_b'])
    return jnp.sum(losses) / B      # reference: loss.sum() / batch_size


# --------------------------------------------------------------------------
# Parameters (deterministic synthetic init, packed/split layouts)
# --------------------------------------------------------------------------

def _init(key, shape, scale=0.1):
    return (scale * jax.random.normal(key, shape)).astype(F32)


def init_params(key, cfg):
    De, Dr, He = cfg['d_emb'], cfg['d_rnn'], cfg['ehid']
    Ld, Dm, V = cfg['labeldim'], cfg['d_mlp'], cfg['doc_vocab']
    Hh = Dr // 2
    K1, K2 = He + Ld, Dr + Ld
    ks = iter(jax.random.split(key, 64))
    p = {}
    p['src_embed'] = _init(next(ks), (V, De))
    p['edgeemb'] = _init(next(ks), (4, Ld))
    # bidirectional sentence encoder, packed [i|f|g|o] per direction
    p['enc_wih_f'] = _init(next(ks), (De, 4 * Hh))
    p['enc_wih_b'] = _init(next(ks), (De, 4 * Hh))
    p['enc_whh_f'] = _init(next(ks), (Hh, 4 * Hh))
    p['enc_whh_b'] = _init(next(ks), (Hh, 4 * Hh))
    p['enc_b_f'] = _init(next(ks), (1, 4 * Hh))      # b_ih + b_hh folded
    p['enc_b_b'] = _init(next(ks), (1, 4 * Hh))
    # GRNGOB gate linears, split by input block (s / e / label)
    p['gate1_ws'] = _init(next(ks), (Dr, K1)); p['gate1_we'] = _init(next(ks), (He, K1))
    p['gate1_wl'] = _init(next(ks), (Ld, K1)); p['gate1_b'] = _init(next(ks), (1, K1))
    p['gate2_we'] = _init(next(ks), (He, K2)); p['gate2_ws'] = _init(next(ks), (Dr, K2))
    p['gate2_wl'] = _init(next(ks), (Ld, K2)); p['gate2_b'] = _init(next(ks), (1, K2))
    # SGRU cells: x-side weights split per input block, columns packed [r|z|c],
    # h-side packed [r|z|u]
    p['s_wx_sent'] = _init(next(ks), (Dr, 3 * Dr))
    p['s_wx_ns'] = _init(next(ks), (Dr, 3 * Dr))
    p['s_wx_ne'] = _init(next(ks), (He + Ld, 3 * Dr))
    p['s_wx_g'] = _init(next(ks), (Dr, 3 * Dr))
    p['s_wh'] = _init(next(ks), (Dr, 3 * Dr))
    p['s_bx'] = _init(next(ks), (1, 3 * Dr))
    p['s_bu'] = _init(next(ks), (1, Dr))
    p['e_wx_ent'] = _init(next(ks), (De, 3 * He))
    p['e_wx_ns'] = _init(next(ks), (Dr + Ld, 3 * He))
    p['e_wx_g'] = _init(next(ks), (Dr, 3 * He))
    p['e_wh'] = _init(next(ks), (He, 3 * He))
    p['e_bx'] = _init(next(ks), (1, 3 * He))
    p['e_bu'] = _init(next(ks), (1, He))
    p['g_wx_s'] = _init(next(ks), (Dr, 3 * Dr))
    p['g_wx_e'] = _init(next(ks), (He, 3 * Dr))
    p['g_wh'] = _init(next(ks), (Dr, 3 * Dr))
    p['g_bx'] = _init(next(ks), (1, 3 * Dr))
    p['g_bu'] = _init(next(ks), (1, Dr))
    # pointer MLPs (linears[3] of the reference is unused by forward -> omitted)
    p['lin0_w'] = _init(next(ks), (Dr, Dm));      p['lin0_b'] = _init(next(ks), (1, Dm))
    p['lin1_w'] = _init(next(ks), (2 * Dr, Dm));  p['lin1_b'] = _init(next(ks), (1, Dm))
    p['lin2_w'] = _init(next(ks), (1, Dm));       p['lin2_b'] = _init(next(ks), (1, 1))
    # decoder LSTM packed [i|f|g|o], bias = b_ih + b_hh
    p['dec_wih'] = _init(next(ks), (Dr, 4 * Dr))
    p['dec_whh'] = _init(next(ks), (Dr, 4 * Dr))
    p['dec_b'] = _init(next(ks), (1, 4 * Dr))
    return p


# --------------------------------------------------------------------------
# Model forward (glue in JAX, hot paths in the three fused Pallas kernels)
# --------------------------------------------------------------------------

def pointer_net_forward(p, cfg, src, doc_num, words, matrix, target, tgt_len):
    B, S = len(doc_num), max(doc_num)
    Dr = cfg['d_rnn']
    L = target.shape[1]
    BS = src.shape[0]

    # ---- bidirectional sentence encoder (final hidden states only) ---------
    # All sentence lengths are equal -> pack/sort of the reference is identity.
    emb_flat = p['src_embed'][jnp.transpose(src).reshape(-1)]      # (T*BS, De), time-major
    hn = encoder_bilstm(emb_flat, p['enc_wih_f'], p['enc_wih_b'],
                        p['enc_whh_f'], p['enc_whh_b'],
                        p['enc_b_f'], p['enc_b_b'], BS)
    sentences = hn.reshape(B, S, Dr)
    smask = (jnp.arange(S)[None, :] < jnp.asarray(doc_num)[:, None]).astype(F32)
    sentences = sentences * smask[:, :, None]

    # ---- graph glue: embedding gathers / adjacency (plain JAX, tiny) --------
    wmask = (words != 1).astype(F32)
    entity_emb = p['src_embed'][words]                             # (B,E,De)
    matrix_t = jnp.transpose(matrix, (0, 2, 1))
    eoh = jax.nn.one_hot(matrix, 4, dtype=F32)                     # (B,S,E,4)
    eoh_t = jax.nn.one_hot(matrix_t, 4, dtype=F32)                 # (B,E,S,4)
    mse = (matrix != 0).astype(F32)                                # (B,S,E)
    mse_t = (matrix_t != 0).astype(F32)                            # (B,E,S)
    s2s = jnp.einsum('bse,bte->bst', mse, mse) != 0
    eyemask = (1.0 - jnp.eye(S)) != 0
    s2smatrix = jnp.logical_and(jnp.logical_and(s2s, eyemask[None]),
                                smask[:, None, :] > 0.5).astype(F32)

    # ---- fused GRNGOB (all gnnl layers in one kernel, grid over batch) ------
    para, _entity_h, g_h = gnn_forward(p, cfg, sentences, entity_emb,
                                       eoh, eoh_t, mse, mse_t, s2smatrix,
                                       smask, wmask)

    # ---- decoder inputs (teacher forcing) + pointer masks (JAX glue) --------
    gathered = sentences[jnp.arange(B)[:, None], target[:, :-1]]   # (B,L-1,Dr)
    dec_in = jnp.concatenate([jnp.zeros((B, 1, Dr), F32), gathered], axis=1)
    dec_tm = jnp.transpose(dec_in, (1, 0, 2)).reshape(L * B, Dr)   # time-major flat
    keyin = jnp.concatenate([sentences, para], axis=-1)            # (B,S,2Dr)
    # TODO(synk): fuse linears[1] into the decoder kernel once S is padded to a
    # sublane multiple (the in-kernel (B,S,2Dr)->(B*S,2Dr) reshape would cross
    # (8,128) tile boundaries at these sizes).
    key = jnp.einsum('bsd,dm->bsm', keyin, p['lin1_w']) + p['lin1_b']  # (B,S,Dm)

    onehot = jax.nn.one_hot(target, S, dtype=F32)                  # (B,L,S)
    cum = jnp.cumsum(onehot, axis=1)
    pm = jnp.concatenate([jnp.zeros((B, 1, S), F32),
                          (cum[:, :-1] > 0).astype(F32)], axis=1)  # (B,L,S)
    pmt = (jnp.arange(S)[None, :] < tgt_len[:, None]).astype(F32)[:, None, :]   # (B,1,S)
    mask = jnp.logical_or(pm > 0.5, pmt < 0.5).astype(F32)         # combined pointer mask
    tm = (jnp.arange(L)[None, :] < tgt_len[:, None]).astype(F32)   # (B,L)

    mask_tm = jnp.transpose(mask, (1, 0, 2))                       # (L,B,S)
    oh_tm = jnp.transpose(onehot, (1, 0, 2))                       # (L,B,S)
    tm_tm = jnp.transpose(tm)[:, :, None]                          # (L,B,1)
    h0 = g_h.reshape(B, Dr)

    # ---- fused batched decoder LSTM + pointer attention + NLL loss ----------
    return decoder_pointer_loss(p, dec_tm, h0, key, mask_tm, oh_tm, tm_tm)


# --------------------------------------------------------------------------

if __name__ == "__main__":
    cfg = dict(d_emb=16, d_rnn=32, ehid=16, labeldim=8, d_mlp=32,
               doc_vocab=50, gnnl=2)

    key = jax.random.PRNGKey(0)
    pkey, skey = jax.random.split(key)
    params = init_params(pkey, cfg)

    B, S, T, E, L = 2, 4, 5, 3, 4
    doc_num = [4, 3]
    src = jax.random.randint(skey, (B * S, T), 2, cfg['doc_vocab'], dtype=jnp.int32)
    words = jnp.array([[5, 7, 1], [9, 3, 1]], dtype=jnp.int32)     # id 1 == entity padding

    # elocs -> sentence/entity relation matrix (plain python, as in the reference)
    elocs = [
        [[([0, 1], 1)], [([2], 2)], []],
        [[([0], 3)], [([1, 2], 1)], []],
    ]
    matrix_np = np.zeros((B, S, E), dtype=np.int32)
    for ib, eloc in enumerate(elocs):
        for ixw, loc in enumerate(eloc):
            for aftersf_ixs, r in loc:
                matrix_np[ib, aftersf_ixs, ixw] = r
    matrix = jnp.asarray(matrix_np)

    target = jnp.array([[2, 0, 3, 1], [2, 0, 1, 0]], dtype=jnp.int32)
    tgt_len = jnp.array([4, 3], dtype=jnp.int32)

    loss = pointer_net_forward(params, cfg, src, doc_num, words, matrix, target, tgt_len)
    jax.block_until_ready(loss)
    assert np.isfinite(float(loss))
    print("KERNEL_OK")
</pallas_src>

<mosaic_0001>
module attributes {stable_mosaic.version = 11 : i64} {
  func.func @_enc_bilstm_kernel(%arg0: memref<40x16xf32, #tpu.memory_space<vmem>>, %arg1: memref<16x64xf32, #tpu.memory_space<vmem>>, %arg2: memref<16x64xf32, #tpu.memory_space<vmem>>, %arg3: memref<16x64xf32, #tpu.memory_space<vmem>>, %arg4: memref<16x64xf32, #tpu.memory_space<vmem>>, %arg5: memref<1x64xf32, #tpu.memory_space<vmem>>, %arg6: memref<1x64xf32, #tpu.memory_space<vmem>>, %arg7: memref<8x32xf32, #tpu.memory_space<vmem>>, %arg8: memref<40x64xf32, #tpu.memory_space<vmem>>, %arg9: memref<40x64xf32, #tpu.memory_space<vmem>>) attributes {dimension_semantics = [], scalar_prefetch = 0 : i64, scratch_operands = 2 : i64, tpu.core_type = #tpu.core_type<tc>} {
    %c0 = arith.constant 0 : index
    %c0_0 = arith.constant 0 : index
    %0 = vector.load %arg0[%c0, %c0_0] : memref<40x16xf32, #tpu.memory_space<vmem>>, vector<40x16xf32>
    %c0_1 = arith.constant 0 : index
    %c0_2 = arith.constant 0 : index
    %1 = vector.load %arg1[%c0_1, %c0_2] : memref<16x64xf32, #tpu.memory_space<vmem>>, vector<16x64xf32>
    %cst = arith.constant dense<0.000000e+00> : vector<40x64xf32>
    %2 = tpu.matmul %0, %1, %cst {dimension_numbers = #tpu.dot_dimension_numbers<[1], [0], [0], [1], [0, 0, 1, 1], [], []>} : vector<40x16xf32>, vector<16x64xf32>, vector<40x64xf32> -> vector<40x64xf32>
    %c0_3 = arith.constant 0 : index
    %c0_4 = arith.constant 0 : index
    %3 = vector.load %arg5[%c0_3, %c0_4] : memref<1x64xf32, #tpu.memory_space<vmem>>, vector<1x64xf32>
    %4 = vector.broadcast %3 : vector<1x64xf32> to vector<40x64xf32>
    %5 = arith.addf %2, %4 : vector<40x64xf32>
    %c0_5 = arith.constant 0 : index
    %c0_6 = arith.constant 0 : index
    %6 = vector.load %arg8[%c0_5, %c0_6] : memref<40x64xf32, #tpu.memory_space<vmem>>, vector<40x64xf32>
    tpu.vector_store %arg8[%c0_5, %c0_6], %5 {strides = array<i32>} : memref<40x64xf32, #tpu.memory_space<vmem>>, vector<40x64xf32>,
    %c0_7 = arith.constant 0 : index
    %c0_8 = arith.constant 0 : index
    %7 = vector.load %arg2[%c0_7, %c0_8] : memref<16x64xf32, #tpu.memory_space<vmem>>, vector<16x64xf32>
    %cst_9 = arith.constant dense<0.000000e+00> : vector<40x64xf32>
    %8 = tpu.matmul %0, %7, %cst_9 {dimension_numbers = #tpu.dot_dimension_numbers<[1], [0], [0], [1], [0, 0, 1, 1], [], []>} : vector<40x16xf32>, vector<16x64xf32>, vector<40x64xf32> -> vector<40x64xf32>
    %c0_10 = arith.constant 0 : index
    %c0_11 = arith.constant 0 : index
    %9 = vector.load %arg6[%c0_10, %c0_11] : memref<1x64xf32, #tpu.memory_space<vmem>>, vector<1x64xf32>
    %10 = vector.broadcast %9 : vector<1x64xf32> to vector<40x64xf32>
    %11 = arith.addf %8, %10 : vector<40x64xf32>
    %c0_12 = arith.constant 0 : index
    %c0_13 = arith.constant 0 : index
    %12 = vector.load %arg9[%c0_12, %c0_13] : memref<40x64xf32, #tpu.memory_space<vmem>>, vector<40x64xf32>
    tpu.vector_store %arg9[%c0_12, %c0_13], %11 {strides = array<i32>} : memref<40x64xf32, #tpu.memory_space<vmem>>, vector<40x64xf32>,
    %c0_14 = arith.constant 0 : index
    %c0_15 = arith.constant 0 : index
    %13 = vector.load %arg3[%c0_14, %c0_15] : memref<16x64xf32, #tpu.memory_space<vmem>>, vector<16x64xf32>
    %c0_16 = arith.constant 0 : index
    %c0_17 = arith.constant 0 : index
    %14 = vector.load %arg4[%c0_16, %c0_17] : memref<16x64xf32, #tpu.memory_space<vmem>>, vector<16x64xf32>
    %cst_18 = arith.constant 0.000000e+00 : f32
    %15 = vector.broadcast %cst_18 : f32 to vector<8x16xf32>
    %c0_i32 = arith.constant 0 : i32
    %c5_i32 = arith.constant 5 : i32
    %16 = arith.addi %c0_i32, %c5_i32 : i32
    %c1_i32 = arith.constant 1 : i32
    %17:4 = scf.for %arg10 = %c0_i32 to %16 step %c1_i32 iter_args(%arg11 = %15, %arg12 = %15, %arg13 = %15, %arg14 = %15) -> (vector<8x16xf32>, vector<8x16xf32>, vector<8x16xf32>, vector<8x16xf32>)  : i32 {
      %c8_i32 = arith.constant 8 : i32
      %20 = arith.muli %arg10, %c8_i32 : i32
      %21 = tpu.assume_multiple %20, 8 : i32
      %c4_i32 = arith.constant 4 : i32
      %22 = arith.subi %c4_i32, %arg10 : i32
      %c8_i32_22 = arith.constant 8 : i32
      %23 = arith.muli %22, %c8_i32_22 : i32
      %24 = tpu.assume_multiple %23, 8 : i32
      %25 = arith.index_cast %21 : i32 to index
      %c0_23 = arith.constant 0 : index
      %26 = vector.load %arg8[%25, %c0_23] : memref<40x64xf32, #tpu.memory_space<vmem>>, vector<8x64xf32>
      %cst_24 = arith.constant dense<0.000000e+00> : vector<8x64xf32>
      %27 = tpu.matmul %arg11, %13, %cst_24 {dimension_numbers = #tpu.dot_dimension_numbers<[1], [0], [0], [1], [0, 0, 1, 1], [], []>} : vector<8x16xf32>, vector<16x64xf32>, vector<8x64xf32> -> vector<8x64xf32>
      %28 = arith.addf %26, %27 : vector<8x64xf32>
      %29 = vector.extract_strided_slice %28 {offsets = [0, 0], sizes = [8, 16], strides = [1, 1]} : vector<8x64xf32> to vector<8x16xf32>
      %cst_25 = arith.constant 5.000000e-01 : f32
      %30 = vector.broadcast %cst_25 : f32 to vector<8x16xf32>
      %31 = arith.mulf %30, %29 : vector<8x16xf32>
      %32 = math.tanh %31 : vector<8x16xf32>
      %cst_26 = arith.constant 1.000000e+00 : f32
      %33 = vector.broadcast %cst_26 : f32 to vector<8x16xf32>
      %34 = arith.addf %32, %33 : vector<8x16xf32>
      %cst_27 = arith.constant 5.000000e-01 : f32
      %35 = vector.broadcast %cst_27 : f32 to vector<8x16xf32>
      %36 = arith.mulf %35, %34 : vector<8x16xf32>
      %37 = vector.extract_strided_slice %28 {offsets = [0, 16], sizes = [8, 16], strides = [1, 1]} : vector<8x64xf32> to vector<8x16xf32>
      %cst_28 = arith.constant 5.000000e-01 : f32
      %38 = vector.broadcast %cst_28 : f32 to vector<8x16xf32>
      %39 = arith.mulf %38, %37 : vector<8x16xf32>
      %40 = math.tanh %39 : vector<8x16xf32>
      %cst_29 = arith.constant 1.000000e+00 : f32
      %41 = vector.broadcast %cst_29 : f32 to vector<8x16xf32>
      %42 = arith.addf %40, %41 : vector<8x16xf32>
      %cst_30 = arith.constant 5.000000e-01 : f32
      %43 = vector.broadcast %cst_30 : f32 to vector<8x16xf32>
      %44 = arith.mulf %43, %42 : vector<8x16xf32>
      %45 = vector.extract_strided_slice %28 {offsets = [0, 32], sizes = [8, 16], strides = [1, 1]} : vector<8x64xf32> to vector<8x16xf32>
      %46 = math.tanh %45 : vector<8x16xf32>
      %47 = vector.extract_strided_slice %28 {offsets = [0, 48], sizes = [8, 16], strides = [1, 1]} : vector<8x64xf32> to vector<8x16xf32>
      %cst_31 = arith.constant 5.000000e-01 : f32
      %48 = vector.broadcast %cst_31 : f32 to vector<8x16xf32>
      %49 = arith.mulf %48, %47 : vector<8x16xf32>
      %50 = math.tanh %49 : vector<8x16xf32>
      %cst_32 = arith.constant 1.000000e+00 : f32
      %51 = vector.broadcast %cst_32 : f32 to vector<8x16xf32>
      %52 = arith.addf %50, %51 : vector<8x16xf32>
      %cst_33 = arith.constant 5.000000e-01 : f32
      %53 = vector.broadcast %cst_33 : f32 to vector<8x16xf32>
      %54 = arith.mulf %53, %52 : vector<8x16xf32>
      %55 = arith.mulf %44, %arg12 : vector<8x16xf32>
      %56 = arith.mulf %36, %46 : vector<8x16xf32>
      %57 = arith.addf %55, %56 : vector<8x16xf32>
      %58 = math.tanh %57 : vector<8x16xf32>
      %59 = arith.mulf %54, %58 : vector<8x16xf32>
      %60 = arith.index_cast %24 : i32 to index
      %c0_34 = arith.constant 0 : index
      %61 = vector.load %arg9[%60, %c0_34] : memref<40x64xf32, #tpu.memory_space<vmem>>, vector<8x64xf32>
      %cst_35 = arith.constant dense<0.000000e+00> : vector<8x64xf32>
      %62 = tpu.matmul %arg13, %14, %cst_35 {dimension_numbers = #tpu.dot_dimension_numbers<[1], [0], [0], [1], [0, 0, 1, 1], [], []>} : vector<8x16xf32>, vector<16x64xf32>, vector<8x64xf32> -> vector<8x64xf32>
      %63 = arith.addf %61, %62 : vector<8x64xf32>
      %64 = vector.extract_strided_slice %63 {offsets = [0, 0], sizes = [8, 16], strides = [1, 1]} : vector<8x64xf32> to vector<8x16xf32>
      %cst_36 = arith.constant 5.000000e-01 : f32
      %65 = vector.broadcast %cst_36 : f32 to vector<8x16xf32>
      %66 = arith.mulf %65, %64 : vector<8x16xf32>
      %67 = math.tanh %66 : vector<8x16xf32>
      %cst_37 = arith.constant 1.000000e+00 : f32
      %68 = vector.broadcast %cst_37 : f32 to vector<8x16xf32>
      %69 = arith.addf %67, %68 : vector<8x16xf32>
      %cst_38 = arith.constant 5.000000e-01 : f32
      %70 = vector.broadcast %cst_38 : f32 to vector<8x16xf32>
      %71 = arith.mulf %70, %69 : vector<8x16xf32>
      %72 = vector.extract_strided_slice %63 {offsets = [0, 16], sizes = [8, 16], strides = [1, 1]} : vector<8x64xf32> to vector<8x16xf32>
      %cst_39 = arith.constant 5.000000e-01 : f32
      %73 = vector.broadcast %cst_39 : f32 to vector<8x16xf32>
      %74 = arith.mulf %73, %72 : vector<8x16xf32>
      %75 = math.tanh %74 : vector<8x16xf32>
      %cst_40 = arith.constant 1.000000e+00 : f32
      %76 = vector.broadcast %cst_40 : f32 to vector<8x16xf32>
      %77 = arith.addf %75, %76 : vector<8x16xf32>
      %cst_41 = arith.constant 5.000000e-01 : f32
      %78 = vector.broadcast %cst_41 : f32 to vector<8x16xf32>
      %79 = arith.mulf %78, %77 : vector<8x16xf32>
      %80 = vector.extract_strided_slice %63 {offsets = [0, 32], sizes = [8, 16], strides = [1, 1]} : vector<8x64xf32> to vector<8x16xf32>
      %81 = math.tanh %80 : vector<8x16xf32>
      %82 = vector.extract_strided_slice %63 {offsets = [0, 48], sizes = [8, 16], strides = [1, 1]} : vector<8x64xf32> to vector<8x16xf32>
      %cst_42 = arith.constant 5.000000e-01 : f32
      %83 = vector.broadcast %cst_42 : f32 to vector<8x16xf32>
      %84 = arith.mulf %83, %82 : vector<8x16xf32>
      %85 = math.tanh %84 : vector<8x16xf32>
      %cst_43 = arith.constant 1.000000e+00 : f32
      %86 = vector.broadcast %cst_43 : f32 to vector<8x16xf32>
      %87 = arith.addf %85, %86 : vector<8x16xf32>
      %cst_44 = arith.constant 5.000000e-01 : f32
      %88 = vector.broadcast %cst_44 : f32 to vector<8x16xf32>
      %89 = arith.mulf %88, %87 : vector<8x16xf32>
      %90 = arith.mulf %79, %arg14 : vector<8x16xf32>
      %91 = arith.mulf %71, %81 : vector<8x16xf32>
      %92 = arith.addf %90, %91 : vector<8x16xf32>
      %93 = math.tanh %92 : vector<8x16xf32>
      %94 = arith.mulf %89, %93 : vector<8x16xf32>
      scf.yield %59, %57, %94, %92 : vector<8x16xf32>, vector<8x16xf32>, vector<8x16xf32>, vector<8x16xf32>
    }
    %c5_i32_19 = arith.constant 5 : i32
    %18 = tpu.concatenate %17#0, %17#2 in 1 : vector<8x16xf32>, vector<8x16xf32> -> vector<8x32xf32>
    %c0_20 = arith.constant 0 : index
    %c0_21 = arith.constant 0 : index
    %19 = vector.load %arg7[%c0_20, %c0_21] : memref<8x32xf32, #tpu.memory_space<vmem>>, vector<8x32xf32>
    tpu.vector_store %arg7[%c0_20, %c0_21], %18 {strides = array<i32>} : memref<8x32xf32, #tpu.memory_space<vmem>>, vector<8x32xf32>,
    return
  }
}

</mosaic_0001>

<llo_original>
// kernel: tpu_custom_call.1
$region0: #{tpu_custom_call.1}
  #allocation0 [shape = 'u32[]', space=smem, size = 0x4, offset = 0x4, fixed_abs, tag = 'smem constant byte address 0x4 - core index']
  #allocation1 [shape = 'u32[144,128]{1,0:T(1,128)}', space=vmem, size = 0x12000, scoped, tag = 'internal scratch']
  #allocation2 [shape = 'f32[40,64]{1,0:T(8,128)}', space=vmem, size = 0x5000, scoped, tag = 'scratch operand']
  #allocation3 [shape = 'f32[40,64]{1,0:T(8,128)}', space=vmem, size = 0x5000, scoped, tag = 'scratch operand']
  %s0 = inlined_call_operand.vmem [shape: f32[40,16], index: 0, kind: input, shape index: {}]
  %s1 = inlined_call_operand.vmem [shape: f32[16,64], index: 1, kind: input, shape index: {}]
  %s2 = inlined_call_operand.vmem [shape: f32[16,64], index: 2, kind: input, shape index: {}]
  %s3 = inlined_call_operand.vmem [shape: f32[16,64], index: 3, kind: input, shape index: {}]
  %s4 = inlined_call_operand.vmem [shape: f32[16,64], index: 4, kind: input, shape index: {}]
  %s5 = inlined_call_operand.vmem [shape: f32[1,64], index: 5, kind: input, shape index: {}]
  %s6 = inlined_call_operand.vmem [shape: f32[1,64], index: 6, kind: input, shape index: {}]
  %s7 = inlined_call_operand.hbm [shape: f32[8,32], index: 7, kind: output, shape index: {}]
  %s8 = sld [smem:[#allocation0]]
  $region45: #{tpu_custom_call.1} parent=0
    _
  %s10 = ssub.s32 1, %s8
  %s11 = scalar_select 0, %s10, %s8
  $region1: #{tpu_custom_call.1} parent=0
    #allocation4 [shape = 'u8[4096]{0}', space=vmem, size = 0x1000, scoped, tag = 'output window, operand 0, single buffered']
    #allocation5 [shape = 's32[1]{0}', space=sflag, size = 0x4, scoped, tag = 'scoped memory for tpu_custom_call.1']
    %12 = vsyncpa [#allocation5], 0
    // Predicated region
    $region2: #{tpu_custom_call.1} parent=1 // pred_check
      _
    $region3: #{tpu_custom_call.1} parent=1 // pred_check_branch
      %14 = sbr.rel (0) target = $region5
    $region4: #{tpu_custom_call.1} parent=1 // pred_region
      _
    $region5: #{tpu_custom_call.1} parent=1 // pred_fallthru
      _
    // Predicated region
    $region6: #{tpu_custom_call.1} parent=1 // pred_check
      _
    $region7: #{tpu_custom_call.1} parent=1 // pred_check_branch
      %16 = sbr.rel (0) target = $region9
    $region8: #{tpu_custom_call.1} parent=1 // pred_region
      _
    $region9: #{tpu_custom_call.1} parent=1 // pred_fallthru
      _
    // Predicated region
    $region10: #{tpu_custom_call.1} parent=1 // pred_check
      _
    $region11: #{tpu_custom_call.1} parent=1 // pred_check_branch
      %18 = sbr.rel (0) target = $region13
    $region12: #{tpu_custom_call.1} parent=1 // pred_region
      _
    $region13: #{tpu_custom_call.1} parent=1 // pred_fallthru
      _
    // Predicated region
    $region14: #{tpu_custom_call.1} parent=1 // pred_check
      _
    $region15: #{tpu_custom_call.1} parent=1 // pred_check_branch
      %20 = sbr.rel (0) target = $region17
    $region16: #{tpu_custom_call.1} parent=1 // pred_region
      _
    $region17: #{tpu_custom_call.1} parent=1 // pred_fallthru
      _
    // Predicated region
    $region18: #{tpu_custom_call.1} parent=1 // pred_check
      _
    $region19: #{tpu_custom_call.1} parent=1 // pred_check_branch
      %22 = sbr.rel (0) target = $region21
    $region20: #{tpu_custom_call.1} parent=1 // pred_region
      _
    $region21: #{tpu_custom_call.1} parent=1 // pred_fallthru
      _
    // Predicated region
    $region22: #{tpu_custom_call.1} parent=1 // pred_check
      _
    $region23: #{tpu_custom_call.1} parent=1 // pred_check_branch
      %24 = sbr.rel (0) target = $region25
    $region24: #{tpu_custom_call.1} parent=1 // pred_region
      _
    $region25: #{tpu_custom_call.1} parent=1 // pred_fallthru
      _
    // Predicated region
    $region26: #{tpu_custom_call.1} parent=1 // pred_check
      _
    $region27: #{tpu_custom_call.1} parent=1 // pred_check_branch
      %26 = sbr.rel (0) target = $region29
    $region28: #{tpu_custom_call.1} parent=1 // pred_region
      _
    $region29: #{tpu_custom_call.1} parent=1 // pred_fallthru
      _
    %v27 = vld [vmem:[%s0] sm:$0xff]
    %v28 = vld [vmem:[%s0 + $0x8] sm:$0xff]
    %v29 = vld [vmem:[%s0 + $0x10] sm:$0xff]
    %v30 = vld [vmem:[%s0 + $0x18] sm:$0xff]
    %v31 = vld [vmem:[%s0 + $0x20] sm:$0xff]
    %v32 = vld [vmem:[%s1] sm:$0xff]
    %v33 = vld [vmem:[%s1 + $0x8] sm:$0xff]
    %v34 = vld [vmem:[%s5] sm:$0x1]
    %v36 = vlaneseq
    %v37 = vshrl.u32 %v36, 7
    %v38 = vsub.s32 0, %v37
    %v39 = vrot.slane %v34, %v38
    %vm41 = vcmask 130048
    %v43 = vsel %vm41, %v27, 0
    %v46 = vsel %vm41, %v28, 0
    %v49 = vsel %vm41, %v29, 0
    %v52 = vsel %vm41, %v30, 0
    %v55 = vsel %vm41, %v31, 0
    %57 = vmatprep.subr.mxu0 0.0
    %58 = vmatpush1.msra.mxu0 %v32
    %59 = vmatprep.subr.mxu0 0.0
    %60 = vmatpush1.msra.mxu0 %v33
    %61 = vmatprep.subr.mxu0 0.0
    %62 = vmatpush1.msra.mxu0 0.0
    %63 = vmatprep.subr.mxu0 0.0
    %64 = vmatpush1.msra.mxu0 0.0
    %65 = vmatprep.subr.mxu0 0.0
    %66 = vmatpush1.msra.mxu0 0.0
    %67 = vmatprep.subr.mxu0 0.0
    %68 = vmatpush1.msra.mxu0 0.0
    %69 = vmatprep.subr.mxu0 0.0
    %70 = vmatpush1.msra.mxu0 0.0
    %71 = vmatprep.subr.mxu0 0.0
    %72 = vmatpush1.msra.mxu0 0.0
    %73 = vmatprep.subr.mxu0 0.0
    %74 = vmatpush1.msra.mxu0 0.0
    %75 = vmatprep.subr.mxu0 0.0
    %76 = vmatpush1.msra.mxu0 0.0
    %77 = vmatprep.subr.mxu0 0.0
    %78 = vmatpush1.msra.mxu0 0.0
    %79 = vmatprep.subr.mxu0 0.0
    %80 = vmatpush1.msra.mxu0 0.0
    %81 = vmatprep.subr.mxu0 0.0
    %82 = vmatpush1.msra.mxu0 0.0
    %83 = vmatprep.subr.mxu0 0.0
    %84 = vmatpush1.msra.mxu0 0.0
    %85 = vmatprep.subr.mxu0 0.0
    %86 = vmatpush1.msra.mxu0 0.0
    %87 = vmatprep.subr.mxu0 0.0
    %88 = vmatpush1.msra.mxu0 0.0
    %89 = vmatprep.subr.mxu0 0.0
    %90 = vmatpush1.msra.mxu0 0.0
    %91 = vmatprep.subr.mxu0 0.0
    %92 = vmatpush1.msra.mxu0 0.0
    %93 = vmatprep.subr.mxu0 0.0
    %94 = vmatpush1.msra.mxu0 0.0
    %95 = vmatprep.subr.mxu0 0.0
    %96 = vmatpush1.msra.mxu0 0.0
    %97 = vmatprep.subr.mxu0 0.0
    %98 = vmatpush1.msra.mxu0 0.0
    %99 = vmatprep.subr.mxu0 0.0
    %100 = vmatpush1.msra.mxu0 0.0
    %101 = vmatprep.subr.mxu0 0.0
    %102 = vmatpush1.msra.mxu0 0.0
    %103 = vmatprep.subr.mxu0 0.0
    %104 = vmatpush1.msra.mxu0 0.0
    %105 = vmatprep.subr.mxu0 0.0
    %106 = vmatpush1.msra.mxu0 0.0
    %107 = vmatprep.subr.mxu0 0.0
    %108 = vmatpush1.msra.mxu0 0.0
    %109 = vmatprep.subr.mxu0 0.0
    %110 = vmatpush1.msra.mxu0 0.0
    %111 = vmatprep.subr.mxu0 0.0
    %112 = vmatpush1.msra.mxu0 0.0
    %113 = vmatprep.subr.mxu0 0.0
    %114 = vmatpush1.msra.mxu0 0.0
    %115 = vmatprep.subr.mxu0 0.0
    %116 = vmatpush1.msra.mxu0 0.0
    %117 = vmatprep.subr.mxu0 0.0
    %118 = vmatpush1.msra.mxu0 0.0
    %119 = vmatprep.subr.mxu0 0.0
    %120 = vmatpush1.msra.mxu0 0.0
    %121 = vmatprep.mubr.f32.mxu0 0.0
    %122 = vmatmul.mubr.f32.gmra.mrb[0].mxu0 %v43
    %v123 = vpop.f32.mrb[0].mxu0
    %v124 = vadd.f32 %v39, %v123
    %v125 = vpop.f32.mrb[0].mxu0
    %126 = vmatprep.mubr.f32.mxu0 0.0
    %127 = vmatmul.mubr.f32.gmra.mrb[0].mxu0 %v46
    %v128 = vpop.f32.mrb[0].mxu0
    %v129 = vadd.f32 %v39, %v128
    %v130 = vpop.f32.mrb[0].mxu0
    %131 = vmatprep.mubr.f32.mxu0 0.0
    %132 = vmatmul.mubr.f32.gmra.mrb[0].mxu0 %v49
    %v133 = vpop.f32.mrb[0].mxu0
    %v134 = vadd.f32 %v39, %v133
    %v135 = vpop.f32.mrb[0].mxu0
    %136 = vmatprep.mubr.f32.mxu0 0.0
    %137 = vmatmul.mubr.f32.gmra.mrb[0].mxu0 %v52
    %v138 = vpop.f32.mrb[0].mxu0
    %v139 = vadd.f32 %v39, %v138
    %v140 = vpop.f32.mrb[0].mxu0
    %141 = vmatprep.mubr.f32.mxu0 0.0
    %142 = vmatmul.mubr.f32.gmra.mrb[0].mxu0 %v55
    %v143 = vpop.f32.mrb[0].mxu0
    %v144 = vadd.f32 %v39, %v143
    %v145 = vpop.f32.mrb[0].mxu0
    %146 = vdwg.mxu0
    %vm147 = vcmask 523264
    %148 = vst.msk [vmem:[#allocation2] sm:$0xff] %vm147, %v124
    %149 = vst.msk [vmem:[#allocation2 + $0x8] sm:$0xff] %vm147, %v129
    %150 = vst.msk [vmem:[#allocation2 + $0x10] sm:$0xff] %vm147, %v134
    %151 = vst.msk [vmem:[#allocation2 + $0x18] sm:$0xff] %vm147, %v139
    %152 = vst.msk [vmem:[#allocation2 + $0x20] sm:$0xff] %vm147, %v144
    %v153 = vld [vmem:[%s2] sm:$0xff]
    %v154 = vld [vmem:[%s2 + $0x8] sm:$0xff]
    %v155 = vld [vmem:[%s6] sm:$0x1]
    %v157 = vlaneseq
    %v158 = vshrl.u32 %v157, 7
    %v159 = vsub.s32 0, %v158
    %v160 = vrot.slane %v155, %v159
    %162 = vmatprep.subr.mxu0 0.0
    %163 = vmatpush1.msra.mxu0 %v153
    %164 = vmatprep.subr.mxu0 0.0
    %165 = vmatpush1.msra.mxu0 %v154
    %166 = vmatprep.subr.mxu0 0.0
    %167 = vmatpush1.msra.mxu0 0.0
    %168 = vmatprep.subr.mxu0 0.0
    %169 = vmatpush1.msra.mxu0 0.0
    %170 = vmatprep.subr.mxu0 0.0
    %171 = vmatpush1.msra.mxu0 0.0
    %172 = vmatprep.subr.mxu0 0.0
    %173 = vmatpush1.msra.mxu0 0.0
    %174 = vmatprep.subr.mxu0 0.0
    %175 = vmatpush1.msra.mxu0 0.0
    %176 = vmatprep.subr.mxu0 0.0
    %177 = vmatpush1.msra.mxu0 0.0
    %178 = vmatprep.subr.mxu0 0.0
    %179 = vmatpush1.msra.mxu0 0.0
    %180 = vmatprep.subr.mxu0 0.0
    %181 = vmatpush1.msra.mxu0 0.0
    %182 = vmatprep.subr.mxu0 0.0
    %183 = vmatpush1.msra.mxu0 0.0
    %184 = vmatprep.subr.mxu0 0.0
    %185 = vmatpush1.msra.mxu0 0.0
    %186 = vmatprep.subr.mxu0 0.0
    %187 = vmatpush1.msra.mxu0 0.0
    %188 = vmatprep.subr.mxu0 0.0
    %189 = vmatpush1.msra.mxu0 0.0
    %190 = vmatprep.subr.mxu0 0.0
    %191 = vmatpush1.msra.mxu0 0.0
    %192 = vmatprep.subr.mxu0 0.0
    %193 = vmatpush1.msra.mxu0 0.0
    %194 = vmatprep.subr.mxu0 0.0
    %195 = vmatpush1.msra.mxu0 0.0
    %196 = vmatprep.subr.mxu0 0.0
    %197 = vmatpush1.msra.mxu0 0.0
    %198 = vmatprep.subr.mxu0 0.0
    %199 = vmatpush1.msra.mxu0 0.0
    %200 = vmatprep.subr.mxu0 0.0
    %201 = vmatpush1.msra.mxu0 0.0
    %202 = vmatprep.subr.mxu0 0.0
    %203 = vmatpush1.msra.mxu0 0.0
    %204 = vmatprep.subr.mxu0 0.0
    %205 = vmatpush1.msra.mxu0 0.0
    %206 = vmatprep.subr.mxu0 0.0
    %207 = vmatpush1.msra.mxu0 0.0
    %208 = vmatprep.subr.mxu0 0.0
    %209 = vmatpush1.msra.mxu0 0.0
    %210 = vmatprep.subr.mxu0 0.0
    %211 = vmatpush1.msra.mxu0 0.0
    %212 = vmatprep.subr.mxu0 0.0
    %213 = vmatpush1.msra.mxu0 0.0
    %214 = vmatprep.subr.mxu0 0.0
    %215 = vmatpush1.msra.mxu0 0.0
    %216 = vmatprep.subr.mxu0 0.0
    %217 = vmatpush1.msra.mxu0 0.0
    %218 = vmatprep.subr.mxu0 0.0
    %219 = vmatpush1.msra.mxu0 0.0
    %220 = vmatprep.subr.mxu0 0.0
    %221 = vmatpush1.msra.mxu0 0.0
    %222 = vmatprep.subr.mxu0 0.0
    %223 = vmatpush1.msra.mxu0 0.0
    %224 = vmatprep.subr.mxu0 0.0
    %225 = vmatpush1.msra.mxu0 0.0
    %226 = vmatprep.mubr.f32.mxu0 0.0
    %227 = vmatmul.mubr.f32.gmra.mrb[0].mxu0 %v43
    %v228 = vpop.f32.mrb[0].mxu0
    %v229 = vadd.f32 %v160, %v228
    %v230 = vpop.f32.mrb[0].mxu0
    %231 = vmatprep.mubr.f32.mxu0 0.0
    %232 = vmatmul.mubr.f32.gmra.mrb[0].mxu0 %v46
    %v233 = vpop.f32.mrb[0].mxu0
    %v234 = vadd.f32 %v160, %v233
    %v235 = vpop.f32.mrb[0].mxu0
    %236 = vmatprep.mubr.f32.mxu0 0.0
    %237 = vmatmul.mubr.f32.gmra.mrb[0].mxu0 %v49
    %v238 = vpop.f32.mrb[0].mxu0
    %v239 = vadd.f32 %v160, %v238
    %v240 = vpop.f32.mrb[0].mxu0
    %241 = vmatprep.mubr.f32.mxu0 0.0
    %242 = vmatmul.mubr.f32.gmra.mrb[0].mxu0 %v52
    %v243 = vpop.f32.mrb[0].mxu0
    %v244 = vadd.f32 %v160, %v243
    %v245 = vpop.f32.mrb[0].mxu0
    %246 = vmatprep.mubr.f32.mxu0 0.0
    %247 = vmatmul.mubr.f32.gmra.mrb[0].mxu0 %v55
    %v248 = vpop.f32.mrb[0].mxu0
    %v249 = vadd.f32 %v160, %v248
    %v250 = vpop.f32.mrb[0].mxu0
    %251 = vdwg.mxu0
    %252 = vst.msk [vmem:[#allocation3] sm:$0xff] %vm147, %v229
    %253 = vst.msk [vmem:[#allocation3 + $0x8] sm:$0xff] %vm147, %v234
    %254 = vst.msk [vmem:[#allocation3 + $0x10] sm:$0xff] %vm147, %v239
    %255 = vst.msk [vmem:[#allocation3 + $0x18] sm:$0xff] %vm147, %v244
    %256 = vst.msk [vmem:[#allocation3 + $0x20] sm:$0xff] %vm147, %v249
    %v257 = vld [vmem:[%s3] sm:$0xff]
    %v258 = vld [vmem:[%s3 + $0x8] sm:$0xff]
    %v259 = vld [vmem:[%s4] sm:$0xff]
    %v260 = vld [vmem:[%s4 + $0x8] sm:$0xff]
    loop: start=0, step=1, limit=5
    $region30: #{tpu_custom_call.1} parent=1 // loop_pre_header
      _
    $region31: #{tpu_custom_call.1} parent=1 // loop_header
      %s262 = sphi 0, %s266
      %p263 = scmp.ge.s32.totalorder %s262, 5
      %v267 = vphi 0.0, %v373
      %v268 = vphi 0.0, %v367
      %v269 = vphi 0.0, %v473
      %v270 = vphi 0.0, %v467
    $region32: #{tpu_custom_call.1} parent=1 // loop_header_branch
      %265 = sbr.rel (%p263) target = $region36
    $region33: #{tpu_custom_call.1} parent=1 // loop_body
      %s271 = smul.u32 %s262, 8
      %s272 = ssub.s32 4, %s262
      %s273 = smul.u32 %s272, 8
      %s274 = scalar_lea.vmem [#allocation2], %s271
      %v275 = vld [vmem:[%s274] sm:$0xff]
      %277 = vrot.lane.b32.xlu0 %v267, 80
      %v278 = vpop.permute.xlu0 %277
      %v279 = vsel %vm41, %v278, 0
      %281 = vmatprep.subr.mxu0 0.0
      %282 = vmatpush1.msra.mxu0 %v257
      %283 = vmatprep.subr.mxu0 0.0
      %284 = vmatpush1.msra.mxu0 %v258
      %285 = vmatprep.subr.mxu0 0.0
      %286 = vmatpush1.msra.mxu0 0.0
      %287 = vmatprep.subr.mxu0 0.0
      %288 = vmatpush1.msra.mxu0 0.0
      %289 = vmatprep.subr.mxu0 0.0
      %290 = vmatpush1.msra.mxu0 0.0
      %291 = vmatprep.subr.mxu0 0.0
      %292 = vmatpush1.msra.mxu0 0.0
      %293 = vmatprep.subr.mxu0 0.0
      %294 = vmatpush1.msra.mxu0 0.0
      %295 = vmatprep.subr.mxu0 0.0
      %296 = vmatpush1.msra.mxu0 0.0
      %297 = vmatprep.subr.mxu0 0.0
      %298 = vmatpush1.msra.mxu0 0.0
      %299 = vmatprep.subr.mxu0 0.0
      %300 = vmatpush1.msra.mxu0 0.0
      %301 = vmatprep.subr.mxu0 0.0
      %302 = vmatpush1.msra.mxu0 0.0
      %303 = vmatprep.subr.mxu0 0.0
      %304 = vmatpush1.msra.mxu0 0.0
      %305 = vmatprep.subr.mxu0 0.0
      %306 = vmatpush1.msra.mxu0 0.0
      %307 = vmatprep.subr.mxu0 0.0
      %308 = vmatpush1.msra.mxu0 0.0
      %309 = vmatprep.subr.mxu0 0.0
      %310 = vmatpush1.msra.mxu0 0.0
      %311 = vmatprep.subr.mxu0 0.0
      %312 = vmatpush1.msra.mxu0 0.0
      %313 = vmatprep.subr.mxu0 0.0
      %314 = vmatpush1.msra.mxu0 0.0
      %315 = vmatprep.subr.mxu0 0.0
      %316 = vmatpush1.msra.mxu0 0.0
      %317 = vmatprep.subr.mxu0 0.0
      %318 = vmatpush1.msra.mxu0 0.0
      %319 = vmatprep.subr.mxu0 0.0
      %320 = vmatpush1.msra.mxu0 0.0
      %321 = vmatprep.subr.mxu0 0.0
      %322 = vmatpush1.msra.mxu0 0.0
      %323 = vmatprep.subr.mxu0 0.0
      %324 = vmatpush1.msra.mxu0 0.0
      %325 = vmatprep.subr.mxu0 0.0
      %326 = vmatpush1.msra.mxu0 0.0
      %327 = vmatprep.subr.mxu0 0.0
      %328 = vmatpush1.msra.mxu0 0.0
      %329 = vmatprep.subr.mxu0 0.0
      %330 = vmatpush1.msra.mxu0 0.0
      %331 = vmatprep.subr.mxu0 0.0
      %332 = vmatpush1.msra.mxu0 0.0
      %333 = vmatprep.subr.mxu0 0.0
      %334 = vmatpush1.msra.mxu0 0.0
      %335 = vmatprep.subr.mxu0 0.0
      %336 = vmatpush1.msra.mxu0 0.0
      %337 = vmatprep.subr.mxu0 0.0
      %338 = vmatpush1.msra.mxu0 0.0
      %339 = vmatprep.subr.mxu0 0.0
      %340 = vmatpush1.msra.mxu0 0.0
      %341 = vmatprep.subr.mxu0 0.0
      %342 = vmatpush1.msra.mxu0 0.0
      %343 = vmatprep.subr.mxu0 0.0
      %344 = vmatpush1.msra.mxu0 0.0
      %345 = vmatprep.mubr.f32.mxu0 0.0
      %346 = vmatmul.mubr.f32.gmra.mrb[0].mxu0 %v279
      %v347 = vpop.f32.mrb[0].mxu0
      %v348 = vadd.f32 0.0, %v347
      %v349 = vpop.f32.mrb[0].mxu0
      %350 = vdwg.mxu0
      %v351 = vadd.f32 %v275, %v348
      %v352 = vmul.f32 %v351, 0.5
      %v353 = vtanh.pop %v352
      %v354 = vadd.f32 %v353, 1.0
      %v355 = vmul.f32 %v354, 0.5
      %v356 = vtanh.pop %v351
      %v357 = vmul.f32 %v355, %v268
      %359 = vrot.lane.b32.xlu0 %v356, 96
      %v360 = vpop.permute.xlu0 %359
      %v362 = vmul.f32 %v355, %v360
      %364 = vrot.lane.b32.xlu0 %v362, 16
      %v365 = vpop.permute.xlu0 %364
      %v367 = vadd.f32 %v357, %v365
      %v368 = vtanh.pop %v367
      %370 = vrot.lane.b32.xlu0 %v368, 32
      %v371 = vpop.permute.xlu0 %370
      %v373 = vmul.f32 %v355, %v371
      %s374 = scalar_lea.vmem [#allocation3], %s273
      %v375 = vld [vmem:[%s374] sm:$0xff]
      %377 = vrot.lane.b32.xlu0 %v269, 80
      %v378 = vpop.permute.xlu0 %377
      %v379 = vsel %vm41, %v378, 0
      %381 = vmatprep.subr.mxu0 0.0
      %382 = vmatpush1.msra.mxu0 %v259
      %383 = vmatprep.subr.mxu0 0.0
      %384 = vmatpush1.msra.mxu0 %v260
      %385 = vmatprep.subr.mxu0 0.0
      %386 = vmatpush1.msra.mxu0 0.0
      %387 = vmatprep.subr.mxu0 0.0
      %388 = vmatpush1.msra.mxu0 0.0
      %389 = vmatprep.subr.mxu0 0.0
      %390 = vmatpush1.msra.mxu0 0.0
      %391 = vmatprep.subr.mxu0 0.0
      %392 = vmatpush1.msra.mxu0 0.0
      %393 = vmatprep.subr.mxu0 0.0
      %394 = vmatpush1.msra.mxu0 0.0
      %395 = vmatprep.subr.mxu0 0.0
      %396 = vmatpush1.msra.mxu0 0.0
      %397 = vmatprep.subr.mxu0 0.0
      %398 = vmatpush1.msra.mxu0 0.0
      %399 = vmatprep.subr.mxu0 0.0
      %400 = vmatpush1.msra.mxu0 0.0
      %401 = vmatprep.subr.mxu0 0.0
      %402 = vmatpush1.msra.mxu0 0.0
      %403 = vmatprep.subr.mxu0 0.0
      %404 = vmatpush1.msra.mxu0 0.0
      %405 = vmatprep.subr.mxu0 0.0
      %406 = vmatpush1.msra.mxu0 0.0
      %407 = vmatprep.subr.mxu0 0.0
      %408 = vmatpush1.msra.mxu0 0.0
      %409 = vmatprep.subr.mxu0 0.0
      %410 = vmatpush1.msra.mxu0 0.0
      %411 = vmatprep.subr.mxu0 0.0
      %412 = vmatpush1.msra.mxu0 0.0
      %413 = vmatprep.subr.mxu0 0.0
      %414 = vmatpush1.msra.mxu0 0.0
      %415 = vmatprep.subr.mxu0 0.0
      %416 = vmatpush1.msra.mxu0 0.0
      %417 = vmatprep.subr.mxu0 0.0
      %418 = vmatpush1.msra.mxu0 0.0
      %419 = vmatprep.subr.mxu0 0.0
      %420 = vmatpush1.msra.mxu0 0.0
      %421 = vmatprep.subr.mxu0 0.0
      %422 = vmatpush1.msra.mxu0 0.0
      %423 = vmatprep.subr.mxu0 0.0
      %424 = vmatpush1.msra.mxu0 0.0
      %425 = vmatprep.subr.mxu0 0.0
      %426 = vmatpush1.msra.mxu0 0.0
      %427 = vmatprep.subr.mxu0 0.0
      %428 = vmatpush1.msra.mxu0 0.0
      %429 = vmatprep.subr.mxu0 0.0
      %430 = vmatpush1.msra.mxu0 0.0
      %431 = vmatprep.subr.mxu0 0.0
      %432 = vmatpush1.msra.mxu0 0.0
      %433 = vmatprep.subr.mxu0 0.0
      %434 = vmatpush1.msra.mxu0 0.0
      %435 = vmatprep.subr.mxu0 0.0
      %436 = vmatpush1.msra.mxu0 0.0
      %437 = vmatprep.subr.mxu0 0.0
      %438 = vmatpush1.msra.mxu0 0.0
      %439 = vmatprep.subr.mxu0 0.0
      %440 = vmatpush1.msra.mxu0 0.0
      %441 = vmatprep.subr.mxu0 0.0
      %442 = vmatpush1.msra.mxu0 0.0
      %443 = vmatprep.subr.mxu0 0.0
      %444 = vmatpush1.msra.mxu0 0.0
      %445 = vmatprep.mubr.f32.mxu0 0.0
      %446 = vmatmul.mubr.f32.gmra.mrb[0].mxu0 %v379
      %v447 = vpop.f32.mrb[0].mxu0
      %v448 = vadd.f32 0.0, %v447
      %v449 = vpop.f32.mrb[0].mxu0
      %450 = vdwg.mxu0
      %v451 = vadd.f32 %v375, %v448
      %v452 = vmul.f32 %v451, 0.5
      %v453 = vtanh.pop %v452
      %v454 = vadd.f32 %v453, 1.0
      %v455 = vmul.f32 %v454, 0.5
      %v456 = vtanh.pop %v451
      %v457 = vmul.f32 %v455, %v270
      %459 = vrot.lane.b32.xlu0 %v456, 96
      %v460 = vpop.permute.xlu0 %459
      %v462 = vmul.f32 %v455, %v460
      %464 = vrot.lane.b32.xlu0 %v462, 16
      %v465 = vpop.permute.xlu0 %464
      %v467 = vadd.f32 %v457, %v465
      %v468 = vtanh.pop %v467
      %470 = vrot.lane.b32.xlu0 %v468, 32
      %v471 = vpop.permute.xlu0 %470
      %v473 = vmul.f32 %v455, %v471
    $region34: #{tpu_custom_call.1} parent=1 // loop_footer
      %s266 = sadd.s32 1, %s262
    $region35: #{tpu_custom_call.1} parent=1 // loop_footer_branch
      %261 = sbr.rel target = $region31
    $region36: #{tpu_custom_call.1} parent=1 // loop_exit
      _
    %475 = vrot.lane.b32.xlu0 %v267, 80
    %v476 = vpop.permute.xlu0 %475
    %479 = vrot.lane.b32.xlu0 %v269, 96
    %v480 = vpop.permute.xlu0 %479
    %v482 = vsel %vm41, %v476, %v480
    %vm483 = vcmask 261120
    %484 = vst.msk [vmem:[#allocation4] sm:$0xff] %vm483, %v482
    // Predicated region
    $region37: #{tpu_custom_call.1} parent=1 // pred_check
      _
    $region38: #{tpu_custom_call.1} parent=1 // pred_check_branch
      %486 = sbr.rel (0) target = $region40
    $region39: #{tpu_custom_call.1} parent=1 // pred_region
      %s488 = ssub.s32 128, 128
      %489 = vsyncadd [#allocation5], %s488
      %s491 = sshll.u32 [#allocation4], 4
      %s492 = int_to_ptr.vmem [resolvable:$true] %s491
      %494 = dma.vmem_to_hbm [thread:$0]  %s492, 128, %s7, [#allocation5]
    $region40: #{tpu_custom_call.1} parent=1 // pred_fallthru
      _
    // Predicated region
    $region41: #{tpu_custom_call.1} parent=1 // pred_check
      _
    $region42: #{tpu_custom_call.1} parent=1 // pred_check_branch
      %496 = sbr.rel (0) target = $region44
    $region43: #{tpu_custom_call.1} parent=1 // pred_region
      %497 = dma.done [#allocation5], 128
    $region44: #{tpu_custom_call.1} parent=1 // pred_fallthru
      _
    %498 = vsyncpa [#allocation5], 1

</llo_original>
